<compile_context>
chip_gen: v6e
topology: v6e:2x2x1
jax: 0.10.0
libtpu: 0.0.40
codegen_flags: <defaults>
</compile_context>

<pallas_src>
import jax
import jax.numpy as jnp
from jax.experimental import pallas as pl
from jax.experimental.pallas import tpu as pltpu


# Measured fraction of HBM roofline vs lane-tile width (v6e elementwise sweep).
_TILE_EFF = {128: 0.29, 256: 0.63, 512: 0.85}


def _pick_lane_tile(length, tile_l_max):
    """Pick a lane tile (multiple of 128) and the padded length.

    Minimizes padded_bytes / pipeline_efficiency, so we neither fall off the
    128-lane-tile cliff (~29% of roofline) nor over-pad short sequences.
    """
    cands = [t for t in (2048, 1024, 512, 256, 128) if t <= max(tile_l_max, 128)]
    best = None
    for t in cands:
        padded = pl.cdiv(length, t) * t
        score = padded / _TILE_EFF.get(t, 0.86)
        if best is None or score < best[0]:
            best = (score, t, padded)
    return best[1], best[2]


def _linear_block_kernel(x_ref, w1_ref, w2_ref, shifts_ref, o_ref):
    # x_ref:      (C, TL)  lane-dense activation tile (batch dim squeezed by BlockSpec)
    # w1_ref:     (C, C)   conv1 weight with BN1 scale folded in (bf16)
    # w2_ref:     (C, C)   conv2 weight with BN2 scale folded in (bf16)
    # shifts_ref: (C, 2)   f32 per-channel shifts: [:,0] = stage1, [:,1] = stage2
    # o_ref:      (C, TL)
    x = x_ref[...]
    x_mxu = x.astype(w1_ref.dtype)          # bf16 MXU operand (no-op if x already bf16)

    # Stage 1: 1x1 conv + folded BN + LeakyReLU(0.2)   (MXU bf16 x bf16 -> f32 acc)
    h = jnp.dot(w1_ref[...], x_mxu, preferred_element_type=jnp.float32)
    h = h + shifts_ref[:, 0:1]
    h = jnp.where(h >= 0.0, h, 0.2 * h)

    # Stage 2: 1x1 conv + folded BN + LeakyReLU(0.2)
    y = jnp.dot(w2_ref[...], h.astype(w2_ref.dtype),
                preferred_element_type=jnp.float32)
    y = y + shifts_ref[:, 1:2]
    y = jnp.where(y >= 0.0, y, 0.2 * y)

    # Dropout == identity in eval mode; residual add in f32 epilogue (v5e: f32 VPU only).
    o_ref[...] = (x.astype(jnp.float32) + y).astype(o_ref.dtype)


def prepare_params(w1, b1, bn1, w2, b2, bn2, eps=1e-5, mxu_dtype=jnp.bfloat16):
    """Fold conv bias + eval-mode BatchNorm1d into bf16 weights + one f32 (C,2) shift.

    One-time parameter preparation (weights and BN stats are static); not on the
    per-forward hot path.  Folding is done in f32, only the final weights are bf16.
    """
    def fold(w, b, gamma, beta, mean, var):
        s = gamma / jnp.sqrt(var + eps)                  # (C,)
        w_folded = (w * s[:, None]).astype(mxu_dtype)    # (C, C) bf16
        shift = (b - mean) * s + beta                    # (C,)  f32
        return w_folded, shift

    w1f, sh1 = fold(w1, b1, *bn1)
    w2f, sh2 = fold(w2, b2, *bn2)
    shifts = jnp.stack([sh1, sh2], axis=1).astype(jnp.float32)   # (C, 2)
    return w1f, w2f, shifts


def linear_block_forward(x, w1f, w2f, shifts, *, tile_l=1024,
                         vmem_limit_bytes=48 * 1024 * 1024):
    """x: (N, C, L).  Returns (N, C, L) = x + block2(block1(x)), eval-mode semantics.

    For maximum HBM savings, store activations upstream in bf16 -- the kernel is
    dtype-generic and keeps the residual/epilogue in f32 regardless.
    """
    n, c, length = x.shape
    in_bytes = x.dtype.itemsize
    w_bytes = w1f.dtype.itemsize
    # NOTE: C should be a multiple of 8 (f32) / 16 (bf16) for dense sublane tiles;
    # at C=32 this holds.  Block shapes equal to the full C extent are always legal.

    tl, lane = _pick_lane_tile(length, tile_l)

    # v7x megacore: ensure the parallel grid has >= 2 steps so both TensorCores run.
    if n * (lane // tl) < 2 and tl >= 256:
        tl //= 2

    # VMEM budget (v7x = 64 MiB/TC): double-buffered in/out tiles + double-buffered
    # resident weights + f32 working set must fit with headroom.
    def footprint(t):
        act = 2 * 2 * (c * t * in_bytes)        # in + out tiles, x2 pipeline buffers
        wts = 2 * 2 * (c * c * w_bytes)         # W1 + W2, x2 pipeline buffers
        work = 3 * c * t * 4                    # x_f32 / h / y live f32 values
        return act + wts + work

    while footprint(tl) > (vmem_limit_bytes * 3) // 4 and tl > 128:
        tl //= 2
    lane = pl.cdiv(length, tl) * tl
    grid = (n, lane // tl)

    xp = x if lane == length else jnp.pad(x, ((0, 0), (0, 0), (0, lane - length)))

    p = n * lane
    cost = pl.CostEstimate(
        flops=4 * c * c * p,                                        # two (C,C)@(C,P) dots
        transcendentals=0,
        bytes_accessed=2 * c * p * in_bytes + 2 * c * c * w_bytes + c * 2 * 4,
    )

    out = pl.pallas_call(
        _linear_block_kernel,
        out_shape=jax.ShapeDtypeStruct((n, c, lane), x.dtype),
        grid_spec=pltpu.PrefetchScalarGridSpec(
            num_scalar_prefetch=0,
            grid=grid,
            in_specs=[
                # Activation tile: batch dim squeezed, C on sublanes, lane-dense tokens.
                pl.BlockSpec((None, c, tl), lambda b, i: (b, 0, i)),
                # Grid-invariant (resident) operands.
                # TODO(synk): at C >= 512, single-buffer these (pipeline_mode=
                # pl.Buffered(1) or a one-shot DMA into scratch) and tile C so
                # 16*C^2 bytes of weights fits the VMEM budget.
                pl.BlockSpec((c, c), lambda b, i: (0, 0)),   # W1 folded (bf16)
                pl.BlockSpec((c, c), lambda b, i: (0, 0)),   # W2 folded (bf16)
                pl.BlockSpec((c, 2), lambda b, i: (0, 0)),   # fused shifts (f32)
            ],
            out_specs=pl.BlockSpec((None, c, tl), lambda b, i: (b, 0, i)),
        ),
        compiler_params=pltpu.CompilerParams(
            dimension_semantics=("parallel", "parallel"),
            vmem_limit_bytes=vmem_limit_bytes,
        ),
        cost_estimate=cost,
    )(xp, w1f, w2f, shifts)

    return out if lane == length else out[..., :length]


def _reference_forward(x, w1, b1, bn1, w2, b2, bn2, eps=1e-5):
    def block(z, w, b, gamma, beta, mean, var):
        y = jnp.einsum("oc,ncl->nol", w, z) + b[None, :, None]
        y = (y - mean[None, :, None]) / jnp.sqrt(var[None, :, None] + eps)
        y = y * gamma[None, :, None] + beta[None, :, None]
        return jnp.where(y >= 0.0, y, 0.2 * y)

    y = block(x, w1, b1, *bn1)
    y = block(y, w2, b2, *bn2)
    return x + y


if __name__ == "__main__":
    # Conv1d(l_size, l_size, k=1) => input channels == linear_size.
    batch, linear_size, length = 2, 32, 16

    key = jax.random.PRNGKey(0)
    ks = jax.random.split(key, 13)

    x = jax.random.normal(ks[0], (batch, linear_size, length), dtype=jnp.float32)

    w1 = 0.1 * jax.random.normal(ks[1], (linear_size, linear_size), dtype=jnp.float32)
    b1 = 0.1 * jax.random.normal(ks[2], (linear_size,), dtype=jnp.float32)
    w2 = 0.1 * jax.random.normal(ks[3], (linear_size, linear_size), dtype=jnp.float32)
    b2 = 0.1 * jax.random.normal(ks[4], (linear_size,), dtype=jnp.float32)

    def make_bn(k1, k2, k3, k4, c):
        gamma = 1.0 + 0.1 * jax.random.normal(k1, (c,), dtype=jnp.float32)
        beta = 0.1 * jax.random.normal(k2, (c,), dtype=jnp.float32)
        mean = 0.1 * jax.random.normal(k3, (c,), dtype=jnp.float32)
        var = jnp.abs(1.0 + 0.1 * jax.random.normal(k4, (c,), dtype=jnp.float32))
        return gamma, beta, mean, var

    bn1 = make_bn(ks[5], ks[6], ks[7], ks[8], linear_size)
    bn2 = make_bn(ks[9], ks[10], ks[11], ks[12], linear_size)

    # One-time parameter folding (BN + bias -> bf16 weights + f32 shifts), then forward.
    w1f, w2f, shifts = prepare_params(w1, b1, bn1, w2, b2, bn2)
    out = jax.block_until_ready(linear_block_forward(x, w1f, w2f, shifts))

    ref = _reference_forward(x, w1, b1, bn1, w2, b2, bn2)
    assert out.shape == (batch, linear_size, length)
    # bf16 MXU operands (weights + in-kernel activation cast) => relaxed tolerance
    # versus the pure-f32 reference; the residual path itself stays f32.
    err = float(jnp.max(jnp.abs(out - ref)))
    assert jnp.allclose(out, ref, atol=2e-2, rtol=2e-2), err

    print("KERNEL_OK")
</pallas_src>

<mosaic_0001>
module attributes {stable_mosaic.version = 11 : i64} {
  func.func @_linear_block_kernel(%arg0: i32, %arg1: i32, %arg2: memref<1x32x256xf32, #tpu.memory_space<vmem>>, %arg3: memref<32x32xbf16, #tpu.memory_space<vmem>>, %arg4: memref<32x32xbf16, #tpu.memory_space<vmem>>, %arg5: memref<32x2xf32, #tpu.memory_space<vmem>>, %arg6: memref<1x32x256xf32, #tpu.memory_space<vmem>>) attributes {dimension_semantics = [#tpu.dimension_semantics<parallel>, #tpu.dimension_semantics<parallel>], iteration_bounds = array<i64: 2, 1>, scalar_prefetch = 0 : i64, scratch_operands = 0 : i64, tpu.core_type = #tpu.core_type<tc>, window_params = [{transform_indices = @transform_0, window_bounds = array<i64: 1, 32, 256>}, {pipeline_mode = #tpu.pipeline_mode<synchronous>, transform_indices = @transform_1, window_bounds = array<i64: 32, 32>}, {pipeline_mode = #tpu.pipeline_mode<synchronous>, transform_indices = @transform_2, window_bounds = array<i64: 32, 32>}, {pipeline_mode = #tpu.pipeline_mode<synchronous>, transform_indices = @transform_3, window_bounds = array<i64: 32, 2>}, {transform_indices = @transform_4, window_bounds = array<i64: 1, 32, 256>}]} {
    %c0 = arith.constant 0 : index
    %c0_0 = arith.constant 0 : index
    %c0_1 = arith.constant 0 : index
    %0 = vector.load %arg2[%c0, %c0_0, %c0_1] : memref<1x32x256xf32, #tpu.memory_space<vmem>>, vector<1x32x256xf32>
    %1 = vector.shape_cast %0 : vector<1x32x256xf32> to vector<32x256xf32>
    %2 = arith.truncf %1 : vector<32x256xf32> to vector<32x256xbf16>
    %c0_2 = arith.constant 0 : index
    %c0_3 = arith.constant 0 : index
    %3 = vector.load %arg3[%c0_2, %c0_3] : memref<32x32xbf16, #tpu.memory_space<vmem>>, vector<32x32xbf16>
    %cst = arith.constant dense<0.000000e+00> : vector<32x256xf32>
    %4 = tpu.matmul %3, %2, %cst {dimension_numbers = #tpu.dot_dimension_numbers<[1], [0], [0], [1], [0, 0, 1, 1], [], []>} : vector<32x32xbf16>, vector<32x256xbf16>, vector<32x256xf32> -> vector<32x256xf32>
    %c0_4 = arith.constant 0 : index
    %c0_5 = arith.constant 0 : index
    %5 = vector.load %arg5[%c0_4, %c0_5] : memref<32x2xf32, #tpu.memory_space<vmem>>, vector<32x1xf32>
    %6 = vector.broadcast %5 : vector<32x1xf32> to vector<32x256xf32>
    %7 = arith.addf %4, %6 : vector<32x256xf32>
    %cst_6 = arith.constant 0.000000e+00 : f32
    %8 = vector.broadcast %cst_6 : f32 to vector<32x256xf32>
    %9 = arith.cmpf oge, %7, %8 : vector<32x256xf32>
    %cst_7 = arith.constant 2.000000e-01 : f32
    %10 = vector.broadcast %cst_7 : f32 to vector<32x256xf32>
    %11 = arith.mulf %10, %7 : vector<32x256xf32>
    %12 = arith.select %9, %7, %11 : vector<32x256xi1>, vector<32x256xf32>
    %c0_8 = arith.constant 0 : index
    %c0_9 = arith.constant 0 : index
    %13 = vector.load %arg4[%c0_8, %c0_9] : memref<32x32xbf16, #tpu.memory_space<vmem>>, vector<32x32xbf16>
    %14 = arith.truncf %12 : vector<32x256xf32> to vector<32x256xbf16>
    %cst_10 = arith.constant dense<0.000000e+00> : vector<32x256xf32>
    %15 = tpu.matmul %13, %14, %cst_10 {dimension_numbers = #tpu.dot_dimension_numbers<[1], [0], [0], [1], [0, 0, 1, 1], [], []>} : vector<32x32xbf16>, vector<32x256xbf16>, vector<32x256xf32> -> vector<32x256xf32>
    %c0_11 = arith.constant 0 : index
    %c1 = arith.constant 1 : index
    %16 = vector.load %arg5[%c0_11, %c1] : memref<32x2xf32, #tpu.memory_space<vmem>>, vector<32x1xf32>
    %17 = vector.broadcast %16 : vector<32x1xf32> to vector<32x256xf32>
    %18 = arith.addf %15, %17 : vector<32x256xf32>
    %cst_12 = arith.constant 0.000000e+00 : f32
    %19 = vector.broadcast %cst_12 : f32 to vector<32x256xf32>
    %20 = arith.cmpf oge, %18, %19 : vector<32x256xf32>
    %cst_13 = arith.constant 2.000000e-01 : f32
    %21 = vector.broadcast %cst_13 : f32 to vector<32x256xf32>
    %22 = arith.mulf %21, %18 : vector<32x256xf32>
    %23 = arith.select %20, %18, %22 : vector<32x256xi1>, vector<32x256xf32>
    %24 = arith.addf %1, %23 : vector<32x256xf32>
    %c0_14 = arith.constant 0 : index
    %c0_15 = arith.constant 0 : index
    %c0_16 = arith.constant 0 : index
    %25 = vector.load %arg6[%c0_14, %c0_15, %c0_16] : memref<1x32x256xf32, #tpu.memory_space<vmem>>, vector<1x32x256xf32>
    %26 = vector.shape_cast %25 : vector<1x32x256xf32> to vector<32x256xf32>
    %27 = vector.shape_cast %24 : vector<32x256xf32> to vector<1x32x256xf32>
    tpu.vector_store %arg6[%c0_14, %c0_15, %c0_16], %27 {strides = array<i32>} : memref<1x32x256xf32, #tpu.memory_space<vmem>>, vector<1x32x256xf32>,
    return
  }
  func.func @transform_0(%arg0: i32, %arg1: i32) -> (i32, i32, i32) {
    %c0_i32 = arith.constant 0 : i32
    %c0_i32_0 = arith.constant 0 : i32
    return %arg0, %c0_i32, %arg1 : i32, i32, i32
  }
  func.func @transform_1(%arg0: i32, %arg1: i32) -> (i32, i32) {
    %c0_i32 = arith.constant 0 : i32
    %c0_i32_0 = arith.constant 0 : i32
    %c0_i32_1 = arith.constant 0 : i32
    return %c0_i32, %c0_i32_0 : i32, i32
  }
  func.func @transform_2(%arg0: i32, %arg1: i32) -> (i32, i32) {
    %c0_i32 = arith.constant 0 : i32
    %c0_i32_0 = arith.constant 0 : i32
    %c0_i32_1 = arith.constant 0 : i32
    return %c0_i32, %c0_i32_0 : i32, i32
  }
  func.func @transform_3(%arg0: i32, %arg1: i32) -> (i32, i32) {
    %c0_i32 = arith.constant 0 : i32
    %c0_i32_0 = arith.constant 0 : i32
    %c0_i32_1 = arith.constant 0 : i32
    return %c0_i32, %c0_i32_0 : i32, i32
  }
  func.func @transform_4(%arg0: i32, %arg1: i32) -> (i32, i32, i32) {
    %c0_i32 = arith.constant 0 : i32
    %c0_i32_0 = arith.constant 0 : i32
    return %arg0, %c0_i32, %arg1 : i32, i32, i32
  }
}

</mosaic_0001>

<llo_original>
// kernel: tpu_custom_call.1
$region0: #{tpu_custom_call.1}
  #allocation0 [shape = 'u32[]', space=smem, size = 0x4, offset = 0x4, fixed_abs, tag = 'smem constant byte address 0x4 - core index']
  #allocation1 [shape = 'u32[144,128]{1,0:T(1,128)}', space=vmem, size = 0x12000, scoped, tag = 'internal scratch']
  %s0 = inlined_call_operand.hbm [shape: f32[2,32,256], index: 0, kind: input, shape index: {}]
  %s1 = inlined_call_operand.vmem [shape: bf16[32,32], index: 1, kind: input, shape index: {}]
  %s2 = inlined_call_operand.vmem [shape: bf16[32,32], index: 2, kind: input, shape index: {}]
  %s3 = inlined_call_operand.vmem [shape: f32[32,2], index: 3, kind: input, shape index: {}]
  %s4 = inlined_call_operand.hbm [shape: f32[2,32,256], index: 4, kind: output, shape index: {}]
  %s5 = sld [smem:[#allocation0]]
  $region53: #{tpu_custom_call.1} parent=0
    _
  %s7 = ssub.s32 1, %s5
  %s8 = scalar_select 0, %s7, %s5
  $region1: #{tpu_custom_call.1} parent=0
    #allocation2 [shape = 'u8[65536]{0}', space=vmem, size = 0x10000, scoped, tag = 'input window, operand 0']
    #allocation3 [shape = 's32[2]{0}', space=sflag, size = 0x8, scoped, tag = 'scoped memory for tpu_custom_call.1']
    #allocation4 [shape = 's32[2]{0}', space=sflag, size = 0x8, scoped, tag = 'scoped memory for tpu_custom_call.1']
    #allocation5 [shape = 'u8[65536]{0}', space=vmem, size = 0x10000, scoped, tag = 'output window, operand 0']
    %9 = vsyncpa [#allocation3], 0
    %s10 = scalar_lea.sflag [#allocation3], 1
    %11 = vsyncpa %s10, 0
    %12 = vsyncpa [#allocation4], 0
    %s13 = scalar_lea.sflag [#allocation4], 1
    %14 = vsyncpa %s13, 0
    loop: start=0, step=1, limit=4
    $region2: #{tpu_custom_call.1} parent=1 // loop_pre_header
      _
    $region3: #{tpu_custom_call.1} parent=1 // loop_header
      %s16 = sphi 0, %s20
      %p17 = scmp.ge.s32.totalorder %s16, 4
      %s23 = sphi 0, %s35
      %s24 = sphi 0, %s31
      %s25 = sphi 0, %s23
      %s26 = sphi 0, %s24
      %s27 = sphi 0, %s25
      %s28 = sphi 0, %s26
      %s40 = sphi 0, %s42
      %s43 = sphi 0, %s40
      %s44 = sphi 0, %s43
      %s60 = sphi 0, %s44
      %s64 = sphi 0, %s64
      %s66 = sphi 0, %s64
      %s67 = sphi 0, %s66
      %s81 = sphi 0, %s67
      %s85 = sphi 0, %s85
      %s87 = sphi 0, %s85
      %s88 = sphi 0, %s87
      %s102 = sphi 0, %s88
      %s106 = sphi 0, %s106
      %s108 = sphi 0, %s106
      %s109 = sphi 0, %s108
      %s123 = sphi 0, %s109
      %s131 = sphi 0, %s133
      %s134 = sphi 0, %s131
      %s135 = sphi 0, %s134
      %s151 = sphi 0, %s135
    $region4: #{tpu_custom_call.1} parent=1 // loop_header_branch
      %19 = sbr.rel (%p17) target = $region8
    $region5: #{tpu_custom_call.1} parent=1 // loop_body
      %s21 = ssub.s32 %s16, 1
      %s22 = ssub.s32 %s16, 2
      %s29 = sadd.s32 1, %s24
      %p30 = scmp.ge.s32.totalorder %s29, 1
      %s31 = scalar_select %p30, 0, %s29
      %s32 = sadd.s32 1, %s23
      %s33 = scalar_select %p30, %s32, %s23
      %p34 = scmp.ge.s32.totalorder %s33, 2
      %s35 = scalar_select %p34, 0, %s33
      %s36 = ssub.s32 %s23, %s35
      %s37 = ssub.s32 %s24, %s31
      %s38 = sor.u32 %s36, %s37
      %p39 = scmp.eq.s32.totalorder %s38, 0
      %s41 = sadd.s32 %s40, 1
      %s42 = scalar_select %p39, %s40, %s41
      %p45 = pneg %p39
      %p46 = scmp.eq.s32.totalorder %s16, 1
      %p47 = por %p45, %p46
      %p48 = scmp.ne.s32.totalorder %s40, %s43
      %p49 = scmp.eq.s32.totalorder %s16, 0
      %p50 = por %p48, %p49
      %p51 = scmp.ne.s32.totalorder %s40, %s43
      %p52 = scmp.eq.s32.totalorder %s21, 1
      %p53 = por %p51, %p52
      %p54 = scmp.ne.s32.totalorder %s43, %s44
      %p55 = scmp.eq.s32.totalorder %s21, 0
      %p56 = por %p54, %p55
      %p57 = scmp.ne.s32.totalorder %s43, %s44
      %p58 = scmp.eq.s32.totalorder %s22, 1
      %p59 = por %p57, %p58
      %p61 = scmp.ne.s32.totalorder %s44, %s60
      %p62 = scmp.eq.s32.totalorder %s22, 0
      %p63 = por %p61, %p62
      %s65 = sadd.s32 %s64, 1
      %p68 = scmp.eq.s32.totalorder %s16, 1
      %p69 = scmp.ne.s32.totalorder %s64, %s66
      %p70 = scmp.eq.s32.totalorder %s16, 0
      %p71 = por %p69, %p70
      %p72 = scmp.ne.s32.totalorder %s64, %s66
      %p73 = scmp.eq.s32.totalorder %s21, 1
      %p74 = por %p72, %p73
      %p75 = scmp.ne.s32.totalorder %s66, %s67
      %p76 = scmp.eq.s32.totalorder %s21, 0
      %p77 = por %p75, %p76
      %p78 = scmp.ne.s32.totalorder %s66, %s67
      %p79 = scmp.eq.s32.totalorder %s22, 1
      %p80 = por %p78, %p79
      %p82 = scmp.ne.s32.totalorder %s67, %s81
      %p83 = scmp.eq.s32.totalorder %s22, 0
      %p84 = por %p82, %p83
      %s86 = sadd.s32 %s85, 1
      %p89 = scmp.eq.s32.totalorder %s16, 1
      %p90 = scmp.ne.s32.totalorder %s85, %s87
      %p91 = scmp.eq.s32.totalorder %s16, 0
      %p92 = por %p90, %p91
      %p93 = scmp.ne.s32.totalorder %s85, %s87
      %p94 = scmp.eq.s32.totalorder %s21, 1
      %p95 = por %p93, %p94
      %p96 = scmp.ne.s32.totalorder %s87, %s88
      %p97 = scmp.eq.s32.totalorder %s21, 0
      %p98 = por %p96, %p97
      %p99 = scmp.ne.s32.totalorder %s87, %s88
      %p100 = scmp.eq.s32.totalorder %s22, 1
      %p101 = por %p99, %p100
      %p103 = scmp.ne.s32.totalorder %s88, %s102
      %p104 = scmp.eq.s32.totalorder %s22, 0
      %p105 = por %p103, %p104
      %s107 = sadd.s32 %s106, 1
      %p110 = scmp.eq.s32.totalorder %s16, 1
      %p111 = scmp.ne.s32.totalorder %s106, %s108
      %p112 = scmp.eq.s32.totalorder %s16, 0
      %p113 = por %p111, %p112
      %p114 = scmp.ne.s32.totalorder %s106, %s108
      %p115 = scmp.eq.s32.totalorder %s21, 1
      %p116 = por %p114, %p115
      %p117 = scmp.ne.s32.totalorder %s108, %s109
      %p118 = scmp.eq.s32.totalorder %s21, 0
      %p119 = por %p117, %p118
      %p120 = scmp.ne.s32.totalorder %s108, %s109
      %p121 = scmp.eq.s32.totalorder %s22, 1
      %p122 = por %p120, %p121
      %p124 = scmp.ne.s32.totalorder %s109, %s123
      %p125 = scmp.eq.s32.totalorder %s22, 0
      %p126 = por %p124, %p125
      %s127 = ssub.s32 %s23, %s35
      %s128 = ssub.s32 %s24, %s31
      %s129 = sor.u32 %s127, %s128
      %p130 = scmp.eq.s32.totalorder %s129, 0
      %s132 = sadd.s32 %s131, 1
      %s133 = scalar_select %p130, %s131, %s132
      %p136 = pneg %p130
      %p137 = scmp.eq.s32.totalorder %s16, 1
      %p138 = por %p136, %p137
      %p139 = scmp.ne.s32.totalorder %s131, %s134
      %p140 = scmp.eq.s32.totalorder %s16, 0
      %p141 = por %p139, %p140
      %p142 = scmp.ne.s32.totalorder %s131, %s134
      %p143 = scmp.eq.s32.totalorder %s21, 1
      %p144 = por %p142, %p143
      %p145 = scmp.ne.s32.totalorder %s134, %s135
      %p146 = scmp.eq.s32.totalorder %s21, 0
      %p147 = por %p145, %p146
      %p148 = scmp.ne.s32.totalorder %s134, %s135
      %p149 = scmp.eq.s32.totalorder %s22, 1
      %p150 = por %p148, %p149
      %p152 = scmp.ne.s32.totalorder %s135, %s151
      %p153 = scmp.eq.s32.totalorder %s22, 0
      %p154 = por %p152, %p153
      %p155 = scmp.le.s32.totalorder 1, %s16
      %p156 = scmp.lt.s32.totalorder %s16, 3
      %p157 = pnand %p155, %p156
      %p158 = pneg %p157
      // Predicated region
      $region9: #{tpu_custom_call.1} parent=5 // pred_check
        _
      $region10: #{tpu_custom_call.1} parent=5 // pred_check_branch
        %160 = sbr.rel (%p157) target = $region12
      $region11: #{tpu_custom_call.1} parent=5 // pred_region
        %s161 = ssub.s32 %s16, 1
        // Predicated region
        $region13: #{tpu_custom_call.1} parent=11 // pred_check
          %p162 = pneg %p77
        $region14: #{tpu_custom_call.1} parent=11 // pred_check_branch
          %164 = sbr.rel (%p162) target = $region16
        $region15: #{tpu_custom_call.1} parent=11 // pred_region
          _
        $region16: #{tpu_custom_call.1} parent=11 // pred_fallthru
          _
        // Predicated region
        $region17: #{tpu_custom_call.1} parent=11 // pred_check
          %p165 = pneg %p98
        $region18: #{tpu_custom_call.1} parent=11 // pred_check_branch
          %167 = sbr.rel (%p165) target = $region20
        $region19: #{tpu_custom_call.1} parent=11 // pred_region
          _
        $region20: #{tpu_custom_call.1} parent=11 // pred_fallthru
          _
        // Predicated region
        $region21: #{tpu_custom_call.1} parent=11 // pred_check
          %p168 = pneg %p119
        $region22: #{tpu_custom_call.1} parent=11 // pred_check_branch
          %170 = sbr.rel (%p168) target = $region24
        $region23: #{tpu_custom_call.1} parent=11 // pred_region
          _
        $region24: #{tpu_custom_call.1} parent=11 // pred_fallthru
          _
      $region12: #{tpu_custom_call.1} parent=5 // pred_fallthru
        _
      %p171 = scmp.lt.s32.totalorder %s16, 2
      // Predicated region
      $region25: #{tpu_custom_call.1} parent=5 // pred_check
        %p172 = pneg %p171
      $region26: #{tpu_custom_call.1} parent=5 // pred_check_branch
        %174 = sbr.rel (%p172) target = $region28
      $region27: #{tpu_custom_call.1} parent=5 // pred_region
        // Predicated region
        $region29: #{tpu_custom_call.1} parent=27 // pred_check
          %p175 = pneg %p50
        $region30: #{tpu_custom_call.1} parent=27 // pred_check_branch
          %177 = sbr.rel (%p175) target = $region32
        $region31: #{tpu_custom_call.1} parent=27 // pred_region
          %s178 = sand.u32 %s40, 1
          %s179 = scalar_lea.sflag [#allocation3], %s178
          %s180 = sand.u32 %s40, 1
          %s181 = smul.addr %s180, 64
          %s182 = scalar_lea.vmem [#allocation2], %s181
          %s183 = smul.u32 2, %s24
          %s185 = ssub.s32 1024, 1024
          %186 = vsyncadd %s179, %s185
          %s187 = smul.addr %s23, 8
          %s188 = sadd.s32 %s183, %s187
          %s189 = smul.addr %s188, 128
          %s190 = scalar_lea.hbm %s0, %s189
          %s191 = sshll.u32 %s182, 4
          %s192 = int_to_ptr.vmem [resolvable:$true] %s191
          %197 = dma.hbm_to_vmem [thread:$0]  %s190, 1024, %s192, %s179, 256, 256, 16
        $region32: #{tpu_custom_call.1} parent=27 // pred_fallthru
          _
      $region28: #{tpu_custom_call.1} parent=5 // pred_fallthru
        _
      %p198 = scmp.le.s32.totalorder 1, %s16
      %p199 = scmp.lt.s32.totalorder %s16, 3
      %p200 = pnand %p198, %p199
      %p201 = pneg %p200
      // Predicated region
      $region33: #{tpu_custom_call.1} parent=5 // pred_check
        _
      $region34: #{tpu_custom_call.1} parent=5 // pred_check_branch
        %203 = sbr.rel (%p200) target = $region36
      $region35: #{tpu_custom_call.1} parent=5 // pred_region
        %s204 = ssub.s32 %s16, 1
        %s205 = sand.u32 %s43, 1
        %s206 = scalar_lea.sflag [#allocation3], %s205
        %s207 = sand.u32 %s43, 1
        %s208 = smul.addr %s207, 64
        %s209 = scalar_lea.vmem [#allocation2], %s208
        // Predicated region
        $region37: #{tpu_custom_call.1} parent=35 // pred_check
          %p210 = pneg %p56
        $region38: #{tpu_custom_call.1} parent=35 // pred_check_branch
          %212 = sbr.rel (%p210) target = $region40
        $region39: #{tpu_custom_call.1} parent=35 // pred_region
          %213 = dma.done %s206, 1024
        $region40: #{tpu_custom_call.1} parent=35 // pred_fallthru
          _
        %s214 = sand.u32 %s43, 1
        %s215 = scalar_lea.sflag [#allocation3], %s214
        %s216 = sand.u32 %s43, 1
        %s217 = smul.addr %s216, 64
        %s218 = scalar_lea.vmem [#allocation2], %s217
        %p219 = pneg %p56
        %p220 = pneg %p53
        %p221 = pneg %p77
        %p222 = pneg %p74
        %p223 = pneg %p98
        %p224 = pneg %p95
        %p225 = pneg %p119
        %p226 = pneg %p116
        %p227 = pneg %p147
        %p228 = pneg %p144
        %s229 = sand.u32 %s134, 1
        %s230 = scalar_lea.sflag [#allocation4], %s229
        %s231 = sand.u32 %s134, 1
        %s232 = smul.addr %s231, 64
        %s233 = scalar_lea.vmem [#allocation5], %s232
        %s234 = smul.u32 2, %s26
        %s235 = smul.u32 2, %s26
        %v237 = vld [vmem:[%s209] sm:$0xff]
        %v238 = vld [vmem:[%s209 + $0x8] sm:$0xff]
        %v239 = vld [vmem:[%s209 + $0x10] sm:$0xff]
        %v240 = vld [vmem:[%s209 + $0x18] sm:$0xff]
        %v241 = vld [vmem:[%s209 + $0x20] sm:$0xff]
        %v242 = vld [vmem:[%s209 + $0x28] sm:$0xff]
        %v243 = vld [vmem:[%s209 + $0x30] sm:$0xff]
        %v244 = vld [vmem:[%s209 + $0x38] sm:$0xff]
        %v245 = vpack.c.bf16 %v239, %v237
        %v246 = vpack.c.bf16 %v240, %v238
        %v247 = vpack.c.bf16 %v243, %v241
        %v248 = vpack.c.bf16 %v244, %v242
        %v249 = vld [vmem:[%s1] sm:$0xf]
        %v250 = vld [vmem:[%s1 + $0x4] sm:$0xf]
        %v251 = vld [vmem:[%s1 + $0x8] sm:$0xf]
        %v252 = vld [vmem:[%s1 + $0xc] sm:$0xf]
        %v253 = vld [vmem:[%s3] sm:$0xff]
        %v254 = vld [vmem:[%s3 + $0x8] sm:$0xff]
        %v255 = vld [vmem:[%s3 + $0x10] sm:$0xff]
        %v256 = vld [vmem:[%s3 + $0x18] sm:$0xff]
        %258 = vset.pattern.permute.xlu0 0
        %259 = vperm.xlu0 %258, %v253
        %v260 = vpop.permute.xlu0 %259
        %263 = vset.pattern.permute.xlu0 0
        %264 = vperm.xlu0 %263, %v254
        %v265 = vpop.permute.xlu0 %264
        %268 = vset.pattern.permute.xlu0 0
        %269 = vperm.xlu0 %268, %v255
        %v270 = vpop.permute.xlu0 %269
        %273 = vset.pattern.permute.xlu0 0
        %274 = vperm.xlu0 %273, %v256
        %v275 = vpop.permute.xlu0 %274
        %v281 = vunpack.c.l.b16 %v249
        %v282 = vunpack.c.l.b16 %v250
        %v283 = vunpack.c.l.b16 %v251
        %v284 = vunpack.c.l.b16 %v252
        %v285 = vpack.c.b16 %v282, %v281
        %v286 = vpack.c.b16 %v284, %v283
        %vm287 = vcmask 261120
        %v289 = vsel %vm287, %v285, 0
        %v292 = vsel %vm287, %v286, 0
        %294 = vmatprep.subr.bf16.mxu0 0
        %295 = vmatpush1.bf16.msra.mxu0 0
        %296 = vmatprep.subr.bf16.mxu0 0
        %297 = vmatpush1.bf16.msra.mxu0 0
        %298 = vmatprep.subr.bf16.mxu0 0
        %299 = vmatpush1.bf16.msra.mxu0 0
        %300 = vmatprep.subr.bf16.mxu0 0
        %301 = vmatpush1.bf16.msra.mxu0 0
        %302 = vmatprep.subr.bf16.mxu0 0
        %303 = vmatpush1.bf16.msra.mxu0 0
        %304 = vmatprep.subr.bf16.mxu0 0
        %305 = vmatpush1.bf16.msra.mxu0 0
        %306 = vmatprep.subr.bf16.mxu0 %v248
        %307 = vmatpush1.bf16.msra.mxu0 %v247
        %308 = vmatprep.subr.bf16.mxu0 %v246
        %309 = vmatpush1.bf16.msra.mxu0 %v245
        %310 = vmatprep.subr.bf16.mxu0 0
        %311 = vmatpush2.bf16.msra.mxu0 0
        %312 = vmatprep.subr.bf16.mxu0 0
        %313 = vmatpush2.bf16.msra.mxu0 0
        %314 = vmatprep.subr.bf16.mxu0 0
        %315 = vmatpush2.bf16.msra.mxu0 0
        %316 = vmatprep.subr.bf16.mxu0 0
        %317 = vmatpush2.bf16.msra.mxu0 0
        %318 = vmatprep.subr.bf16.mxu0 0
        %319 = vmatpush2.bf16.msra.mxu0 0
        %320 = vmatprep.subr.bf16.mxu0 0
        %321 = vmatpush2.bf16.msra.mxu0 0
        %322 = vmatprep.subr.bf16.mxu0 0
        %323 = vmatpush2.bf16.msra.mxu0 0
        %324 = vmatprep.subr.bf16.mxu0 0
        %325 = vmatpush2.bf16.msra.mxu0 0
        %326 = vmatprep.mubr.bf16.mxu0 0
        %327 = vmatmul.mubr.bf16.gmra.mxu0 %v289
        %v328 = vpop.f32.mrf.mxu0
        %v329 = vadd.f32 %v260, %v328
        %v330 = vpop.f32.mrf.mxu0
        %v331 = vadd.f32 %v260, %v330
        %v332 = vpop.f32.mrf.mxu0
        %v333 = vadd.f32 %v265, %v332
        %v334 = vpop.f32.mrf.mxu0
        %v335 = vadd.f32 %v265, %v334
        %336 = vmatprep.mubr.bf16.mxu0 0
        %337 = vmatmul.mubr.bf16.gmra.mxu0 %v292
        %v338 = vpop.f32.mrf.mxu0
        %v339 = vadd.f32 %v270, %v338
        %v340 = vpop.f32.mrf.mxu0
        %v341 = vadd.f32 %v270, %v340
        %v342 = vpop.f32.mrf.mxu0
        %v343 = vadd.f32 %v275, %v342
        %v344 = vpop.f32.mrf.mxu0
        %v345 = vadd.f32 %v275, %v344
        %346 = vdwg.mxu0
        %vm347 = vcmp.ge.f32.partialorder %v329, 0.0
        %vm348 = vcmp.ge.f32.partialorder %v331, 0.0
        %vm349 = vcmp.ge.f32.partialorder %v333, 0.0
        %vm350 = vcmp.ge.f32.partialorder %v335, 0.0
        %vm351 = vcmp.ge.f32.partialorder %v339, 0.0
        %vm352 = vcmp.ge.f32.partialorder %v341, 0.0
        %vm353 = vcmp.ge.f32.partialorder %v343, 0.0
        %vm354 = vcmp.ge.f32.partialorder %v345, 0.0
        %v355 = vmul.f32 %v329, 0.2
        %v356 = vmul.f32 %v331, 0.2
        %v357 = vmul.f32 %v333, 0.2
        %v358 = vmul.f32 %v335, 0.2
        %v359 = vmul.f32 %v339, 0.2
        %v360 = vmul.f32 %v341, 0.2
        %v361 = vmul.f32 %v343, 0.2
        %v362 = vmul.f32 %v345, 0.2
        %v363 = vsel %vm347, %v329, %v355
        %v364 = vsel %vm348, %v331, %v356
        %v365 = vsel %vm349, %v333, %v357
        %v366 = vsel %vm350, %v335, %v358
        %v367 = vsel %vm351, %v339, %v359
        %v368 = vsel %vm352, %v341, %v360
        %v369 = vsel %vm353, %v343, %v361
        %v370 = vsel %vm354, %v345, %v362
        %v371 = vld [vmem:[%s2] sm:$0xf]
        %v372 = vld [vmem:[%s2 + $0x4] sm:$0xf]
        %v373 = vld [vmem:[%s2 + $0x8] sm:$0xf]
        %v374 = vld [vmem:[%s2 + $0xc] sm:$0xf]
        %v375 = vpack.c.bf16 %v365, %v363
        %v376 = vpack.c.bf16 %v366, %v364
        %v377 = vpack.c.bf16 %v369, %v367
        %v378 = vpack.c.bf16 %v370, %v368
        %379 = vset.pattern.permute.xlu0 1
        %380 = vperm.xlu0 %379, %v253
        %v381 = vpop.permute.xlu0 %380
        %383 = vset.pattern.permute.xlu0 1
        %384 = vperm.xlu0 %383, %v254
        %v385 = vpop.permute.xlu0 %384
        %387 = vset.pattern.permute.xlu0 1
        %388 = vperm.xlu0 %387, %v255
        %v389 = vpop.permute.xlu0 %388
        %391 = vset.pattern.permute.xlu0 1
        %392 = vperm.xlu0 %391, %v256
        %v393 = vpop.permute.xlu0 %392
        %v399 = vunpack.c.l.b16 %v371
        %v400 = vunpack.c.l.b16 %v372
        %v401 = vunpack.c.l.b16 %v373
        %v402 = vunpack.c.l.b16 %v374
        %v403 = vpack.c.b16 %v400, %v399
        %v404 = vpack.c.b16 %v402, %v401
        %v406 = vsel %vm287, %v403, 0
        %v409 = vsel %vm287, %v404, 0
        %411 = vmatprep.subr.bf16.mxu0 0
        %412 = vmatpush1.bf16.msra.mxu0 0
        %413 = vmatprep.subr.bf16.mxu0 0
        %414 = vmatpush1.bf16.msra.mxu0 0
        %415 = vmatprep.subr.bf16.mxu0 0
        %416 = vmatpush1.bf16.msra.mxu0 0
        %417 = vmatprep.subr.bf16.mxu0 0
        %418 = vmatpush1.bf16.msra.mxu0 0
        %419 = vmatprep.subr.bf16.mxu0 0
        %420 = vmatpush1.bf16.msra.mxu0 0
        %421 = vmatprep.subr.bf16.mxu0 0
        %422 = vmatpush1.bf16.msra.mxu0 0
        %423 = vmatprep.subr.bf16.mxu0 %v378
        %424 = vmatpush1.bf16.msra.mxu0 %v377
        %425 = vmatprep.subr.bf16.mxu0 %v376
        %426 = vmatpush1.bf16.msra.mxu0 %v375
        %427 = vmatprep.subr.bf16.mxu0 0
        %428 = vmatpush2.bf16.msra.mxu0 0
        %429 = vmatprep.subr.bf16.mxu0 0
        %430 = vmatpush2.bf16.msra.mxu0 0
        %431 = vmatprep.subr.bf16.mxu0 0
        %432 = vmatpush2.bf16.msra.mxu0 0
        %433 = vmatprep.subr.bf16.mxu0 0
        %434 = vmatpush2.bf16.msra.mxu0 0
        %435 = vmatprep.subr.bf16.mxu0 0
        %436 = vmatpush2.bf16.msra.mxu0 0
        %437 = vmatprep.subr.bf16.mxu0 0
        %438 = vmatpush2.bf16.msra.mxu0 0
        %439 = vmatprep.subr.bf16.mxu0 0
        %440 = vmatpush2.bf16.msra.mxu0 0
        %441 = vmatprep.subr.bf16.mxu0 0
        %442 = vmatpush2.bf16.msra.mxu0 0
        %443 = vmatprep.mubr.bf16.mxu0 0
        %444 = vmatmul.mubr.bf16.gmra.mxu0 %v406
        %v445 = vpop.f32.mrf.mxu0
        %v446 = vadd.f32 %v381, %v445
        %v447 = vpop.f32.mrf.mxu0
        %v448 = vadd.f32 %v381, %v447
        %v449 = vpop.f32.mrf.mxu0
        %v450 = vadd.f32 %v385, %v449
        %v451 = vpop.f32.mrf.mxu0
        %v452 = vadd.f32 %v385, %v451
        %453 = vmatprep.mubr.bf16.mxu0 0
        %454 = vmatmul.mubr.bf16.gmra.mxu0 %v409
        %v455 = vpop.f32.mrf.mxu0
        %v456 = vadd.f32 %v389, %v455
        %v457 = vpop.f32.mrf.mxu0
        %v458 = vadd.f32 %v389, %v457
        %v459 = vpop.f32.mrf.mxu0
        %v460 = vadd.f32 %v393, %v459
        %v461 = vpop.f32.mrf.mxu0
        %v462 = vadd.f32 %v393, %v461
        %463 = vdwg.mxu0
        %vm464 = vcmp.ge.f32.partialorder %v446, 0.0
        %vm465 = vcmp.ge.f32.partialorder %v448, 0.0
        %vm466 = vcmp.ge.f32.partialorder %v450, 0.0
        %vm467 = vcmp.ge.f32.partialorder %v452, 0.0
        %vm468 = vcmp.ge.f32.partialorder %v456, 0.0
        %vm469 = vcmp.ge.f32.partialorder %v458, 0.0
        %vm470 = vcmp.ge.f32.partialorder %v460, 0.0
        %vm471 = vcmp.ge.f32.partialorder %v462, 0.0
        %v472 = vmul.f32 %v446, 0.2
        %v473 = vmul.f32 %v448, 0.2
        %v474 = vmul.f32 %v450, 0.2
        %v475 = vmul.f32 %v452, 0.2
        %v476 = vmul.f32 %v456, 0.2
        %v477 = vmul.f32 %v458, 0.2
        %v478 = vmul.f32 %v460, 0.2
        %v479 = vmul.f32 %v462, 0.2
        %v480 = vsel %vm464, %v446, %v472
        %v481 = vsel %vm465, %v448, %v473
        %v482 = vsel %vm466, %v450, %v474
        %v483 = vsel %vm467, %v452, %v475
        %v484 = vsel %vm468, %v456, %v476
        %v485 = vsel %vm469, %v458, %v477
        %v486 = vsel %vm470, %v460, %v478
        %v487 = vsel %vm471, %v462, %v479
        %v488 = vadd.f32 %v237, %v480
        %v489 = vadd.f32 %v238, %v481
        %v490 = vadd.f32 %v239, %v482
        %v491 = vadd.f32 %v240, %v483
        %v492 = vadd.f32 %v241, %v484
        %v493 = vadd.f32 %v242, %v485
        %v494 = vadd.f32 %v243, %v486
        %v495 = vadd.f32 %v244, %v487
        %496 = vst [vmem:[%s233] sm:$0xff] %v488
        %497 = vst [vmem:[%s233 + $0x8] sm:$0xff] %v489
        %498 = vst [vmem:[%s233 + $0x10] sm:$0xff] %v490
        %499 = vst [vmem:[%s233 + $0x18] sm:$0xff] %v491
        %500 = vst [vmem:[%s233 + $0x20] sm:$0xff] %v492
        %501 = vst [vmem:[%s233 + $0x28] sm:$0xff] %v493
        %502 = vst [vmem:[%s233 + $0x30] sm:$0xff] %v494
        %503 = vst [vmem:[%s233 + $0x38] sm:$0xff] %v495
        %s504 = sand.u32 %s134, 1
        %s505 = scalar_lea.sflag [#allocation4], %s504
        %s506 = sand.u32 %s134, 1
        %s507 = smul.addr %s506, 64
        %s508 = scalar_lea.vmem [#allocation5], %s507
        // Predicated region
        $region41: #{tpu_custom_call.1} parent=35 // pred_check
          %p509 = pneg %p144
        $region42: #{tpu_custom_call.1} parent=35 // pred_check_branch
          %511 = sbr.rel (%p509) target = $region44
        $region43: #{tpu_custom_call.1} parent=35 // pred_region
          %s512 = smul.u32 2, %s26
          %s514 = ssub.s32 1024, 1024
          %515 = vsyncadd %s505, %s514
          %s516 = smul.addr %s25, 8
          %s517 = sadd.s32 %s512, %s516
          %s518 = smul.addr %s517, 128
          %s519 = scalar_lea.hbm %s4, %s518
          %s520 = sshll.u32 %s508, 4
          %s521 = int_to_ptr.vmem [resolvable:$true] %s520
          %526 = dma.vmem_to_hbm [thread:$0]  %s521, 1024, %s519, %s505, 256, 256, 16
        $region44: #{tpu_custom_call.1} parent=35 // pred_fallthru
          _
      $region36: #{tpu_custom_call.1} parent=5 // pred_fallthru
        _
      %p527 = scmp.le.s32.totalorder 2, %s16
      // Predicated region
      $region45: #{tpu_custom_call.1} parent=5 // pred_check
        %p528 = pneg %p527
      $region46: #{tpu_custom_call.1} parent=5 // pred_check_branch
        %530 = sbr.rel (%p528) target = $region48
      $region47: #{tpu_custom_call.1} parent=5 // pred_region
        %s531 = ssub.s32 %s16, 2
        // Predicated region
        $region49: #{tpu_custom_call.1} parent=47 // pred_check
          %p532 = pneg %p150
        $region50: #{tpu_custom_call.1} parent=47 // pred_check_branch
          %534 = sbr.rel (%p532) target = $region52
        $region51: #{tpu_custom_call.1} parent=47 // pred_region
          %s535 = sand.u32 %s135, 1
          %s536 = scalar_lea.sflag [#allocation4], %s535
          %s537 = sand.u32 %s135, 1
          %s538 = smul.addr %s537, 64
          %s539 = scalar_lea.vmem [#allocation5], %s538
          %540 = dma.done %s536, 1024
        $region52: #{tpu_custom_call.1} parent=47 // pred_fallthru
          _
      $region48: #{tpu_custom_call.1} parent=5 // pred_fallthru
        _
    $region6: #{tpu_custom_call.1} parent=1 // loop_footer
      %s20 = sadd.s32 1, %s16
    $region7: #{tpu_custom_call.1} parent=1 // loop_footer_branch
      %15 = sbr.rel target = $region3
    $region8: #{tpu_custom_call.1} parent=1 // loop_exit
      _
    %541 = vsyncpa [#allocation3], 1
    %s542 = scalar_lea.sflag [#allocation3], 1
    %543 = vsyncpa %s542, 1
    %544 = vsyncpa [#allocation4], 1
    %s545 = scalar_lea.sflag [#allocation4], 1
    %546 = vsyncpa %s545, 1

</llo_original>
